<compile_context>
chip_gen: v5e
topology: v5e:2x2
jax: 0.10.0
libtpu: 0.0.40
codegen_flags: <defaults>
</compile_context>

<pallas_src>
import math
import functools

import jax
import jax.numpy as jnp
import numpy as np
from jax.experimental import pallas as pl
from jax.experimental.pallas import tpu as pltpu

BN_EPS = 1e-5

# order of the weight blocks inside the packed weight slab
_W_ORDER = ("m1w0", "m1w1", "m2w0", "m2w1",
            "q1w", "k1w", "v1w", "q2w", "k2w", "v2w", "ww")

# rows of the packed bias / BN slab:
#  0..3  : m1b0, m1gamma, m1beta, m1b1
#  4..7  : m2b0, m2gamma, m2beta, m2b1
#  8..13 : q1b*nf, k1b, v1b, q2b*nf, k2b, v2b
#  14    : wb
_VEC_ROWS = 16


def _round_up(x, m):
    return (x + m - 1) // m * m


def _weight_block_layout(input_dim1, input_dim2, dim):
    """(row-offset, row-count) per weight in the packed (total_rows, f_pad) slab."""
    in_dims = {"m1w0": input_dim1, "m2w0": input_dim2}
    blocks = {}
    off = 0
    for name in _W_ORDER:
        rows = in_dims.get(name, dim)
        blocks[name] = (off, rows)
        off = _round_up(off + rows, 32)   # 32-row alignment is safe for f32 & bf16
    total_rows = _round_up(off, 32)
    f_pad = _round_up(dim, 128)           # uniform lane width (lane-dense everywhere)
    return blocks, total_rows, f_pad


# ---------------------------------------------------------------------------
# the fused CMFF kernel (gridless: everything fits in VMEM at these shapes)
# ---------------------------------------------------------------------------
def cmff_kernel(x1_ref, x2_ref, w_ref, vec_ref, out_ref,
                *, dim, n_rows, n_pad, blocks, approx_recip):
    f32 = jnp.float32
    mm_dtype = w_ref.dtype                 # matmul operand dtype (f32 or bf16)

    vh = vec_ref[...]                      # (16, f_pad) f32 bias / BN rows

    def vrow(i):                           # (1, f_pad) row of the bias slab
        return vh[i:i + 1, :]

    def wblk(name):                        # static, sublane-aligned slab slice
        off, rows = blocks[name]
        return w_ref[off:off + rows, :]

    def mm(a, name):                       # a must already be in mm_dtype
        return jnp.dot(a, wblk(name), preferred_element_type=f32)

    def mlp(x, w0, b0, g, bt, w1, b1):
        # Linear -> ReLU -> BatchNorm1d (train-mode batch stats, biased var)
        # -> Dropout (identity) -> Linear.  Element-wise math stays f32 (VPU).
        h = jnp.maximum(mm(x, w0) + vrow(b0), 0.0)
        mean = jnp.mean(h, axis=0, keepdims=True)
        var = jnp.mean((h - mean) ** 2, axis=0, keepdims=True)
        h = (h - mean) * jax.lax.rsqrt(var + BN_EPS) * vrow(g) + vrow(bt)
        # TODO(synk): torch.nn.Dropout(0.2) is stochastic; treated as identity
        # (eval semantics) while BN uses train-mode batch statistics.
        return mm(h[:, :dim].astype(mm_dtype), w1) + vrow(b1)

    x1 = x1_ref[...].astype(mm_dtype)
    x2 = x2_ref[...].astype(mm_dtype)

    h1 = mlp(x1, "m1w0", 0, 1, 2, "m1w1", 3)    # (N, f_pad) f32, lanes >= dim are 0
    h2 = mlp(x2, "m2w0", 4, 5, 6, "m2w1", 7)

    # cast each activation to the matmul dtype exactly once, then reuse
    h1m = h1[:, :dim].astype(mm_dtype)          # offset-0 lane slice (free)
    h2m = h2[:, :dim].astype(mm_dtype)

    # norm_fact is folded into q1w/q2w (and their biases) at prep time
    q1 = mm(h1m, "q1w") + vrow(8)               # (N, f_pad), lanes >= dim are 0
    k1 = mm(h1m, "k1w") + vrow(9)
    v1 = mm(h1m, "v1w") + vrow(10)
    q2 = mm(h2m, "q2w") + vrow(11)
    k2 = mm(h2m, "k2w") + vrow(12)
    v2 = mm(h2m, "v2w") + vrow(13)

    q1m = q1[:, :dim].astype(mm_dtype)          # (N, dim)
    q2m = q2[:, :dim].astype(mm_dtype)
    k1m = k1.astype(mm_dtype)                   # (N, f_pad), padded lanes exactly 0
    k2m = k2.astype(mm_dtype)

    def qTk(qm, km):                            # q^T k, contracting over the batch axis
        return jax.lax.dot_general(qm, km, (((0,), (0,)), ((), ())),
                                   preferred_element_type=f32)

    def softmax0(s):                            # softmax over dim 0 (per column)
        s = s - jnp.max(s, axis=0, keepdims=True)
        e = jnp.exp(s)
        return e * pl.reciprocal(jnp.sum(e, axis=0, keepdims=True),
                                 approx=approx_recip)

    # (dim, f_pad); columns >= dim are harmless (never read back)
    atten1 = softmax0(qTk(q1m, k1m)) + softmax0(qTk(q2m, k1m))
    atten2 = softmax0(qTk(q1m, k2m)) + softmax0(qTk(q2m, k2m))

    v1m = v1[:, :dim].astype(mm_dtype)
    v2m = v2[:, :dim].astype(mm_dtype)
    out12 = (jnp.dot(v1m, atten1.astype(mm_dtype), preferred_element_type=f32) +
             jnp.dot(v2m, atten2.astype(mm_dtype), preferred_element_type=f32))
    output = mm(out12[:, :dim].astype(mm_dtype), "ww") + vrow(14)   # (N, f_pad)

    # lane-dense (f_pad-wide) stores only — no masked vst
    out_ref[0:n_rows, :] = output.astype(out_ref.dtype)
    out_ref[n_pad:n_pad + dim, :] = atten1.astype(out_ref.dtype)
    out_ref[n_pad + dim:n_pad + 2 * dim, :] = atten2.astype(out_ref.dtype)


# ---------------------------------------------------------------------------
# parameter construction (deterministic, synthetic, PyTorch (out, in) layout)
# ---------------------------------------------------------------------------
def _kaiming_normal(key, out_dim, in_dim):
    std = math.sqrt(2.0 / in_dim)
    return std * jax.random.normal(key, (out_dim, in_dim), dtype=jnp.float32)


def init_cmff_params(key, input_dim1, input_dim2, hidden, dim_k, dim_v):
    keys = jax.random.split(key, 16)
    p = {}
    p["m1w0"] = _kaiming_normal(keys[0], hidden, input_dim1)
    p["m1b0"] = jnp.zeros((hidden,), jnp.float32)
    p["m1g"] = jnp.ones((hidden,), jnp.float32)
    p["m1bt"] = jnp.zeros((hidden,), jnp.float32)
    p["m1w1"] = _kaiming_normal(keys[1], hidden, hidden)
    p["m1b1"] = jnp.zeros((hidden,), jnp.float32)
    p["m2w0"] = _kaiming_normal(keys[2], hidden, input_dim2)
    p["m2b0"] = jnp.zeros((hidden,), jnp.float32)
    p["m2g"] = jnp.ones((hidden,), jnp.float32)
    p["m2bt"] = jnp.zeros((hidden,), jnp.float32)
    p["m2w1"] = _kaiming_normal(keys[3], hidden, hidden)
    p["m2b1"] = jnp.zeros((hidden,), jnp.float32)

    def lin(k, out_dim, in_dim):
        bound = 1.0 / math.sqrt(in_dim)
        kw, kb = jax.random.split(k)
        w = jax.random.uniform(kw, (out_dim, in_dim), jnp.float32, -bound, bound)
        b = jax.random.uniform(kb, (out_dim,), jnp.float32, -bound, bound)
        return w, b

    p["q1w"], p["q1b"] = lin(keys[4], dim_k, hidden)
    p["k1w"], p["k1b"] = lin(keys[5], dim_k, hidden)
    p["v1w"], p["v1b"] = lin(keys[6], dim_v, hidden)
    p["q2w"], p["q2b"] = lin(keys[7], dim_k, hidden)
    p["k2w"], p["k2b"] = lin(keys[8], dim_k, hidden)
    p["v2w"], p["v2b"] = lin(keys[9], dim_v, hidden)
    p["ww"], p["wb"] = lin(keys[10], hidden, hidden)
    return p


# ---------------------------------------------------------------------------
# per-generation defaults
# ---------------------------------------------------------------------------
def default_matmul_dtype():
    # f32 on v5e and older (no bf16 VPU/EUP; bf16 pack/unpack is pure overhead
    # at these tiny shapes); bf16 on v6e / v7x where the MXU is bf16-native.
    try:
        kind = jax.devices()[0].device_kind.lower()
    except Exception:
        return jnp.float32
    if ("v6" in kind) or ("v7" in kind):
        return jnp.bfloat16
    return jnp.float32


def _vmem_capacity_bytes():
    try:
        return int(pltpu.get_tpu_info().vmem_capacity_bytes)
    except Exception:
        return 64 << 20        # conservative: v7x per-TensorCore VMEM


# ---------------------------------------------------------------------------
# one-time parameter prep: transpose / pad / pack into 2 slabs (NOT per call)
# ---------------------------------------------------------------------------
def prepare_cmff_params(params, matmul_dtype=None):
    if matmul_dtype is None:
        matmul_dtype = default_matmul_dtype()
    p = params
    hidden = p["m1w0"].shape[0]
    dim_k = p["q1w"].shape[0]
    dim_v = p["v1w"].shape[0]
    # The PyTorch forward only type-checks when dim_k == dim_v == hidden.
    assert dim_k == dim_v == hidden, "CMFF forward requires dim_k == dim_v == hidden"
    input_dim1 = p["m1w0"].shape[1]
    input_dim2 = p["m2w0"].shape[1]
    dim = hidden

    blocks, total_rows, f_pad = _weight_block_layout(input_dim1, input_dim2, dim)
    nf = 1.0 / math.sqrt(dim_k)

    # --- weight slab: every weight pre-transposed to (in, out), out padded to
    # f_pad lanes with zeros, stacked at 32-row-aligned offsets ----------------
    w_np = np.zeros((total_rows, f_pad), np.float32)

    def put(name, w, scale=1.0):
        off, rows = blocks[name]
        wt = np.asarray(w, np.float32).T * scale            # (in, out)
        w_np[off:off + rows, :wt.shape[1]] = wt

    put("m1w0", p["m1w0"]); put("m1w1", p["m1w1"])
    put("m2w0", p["m2w0"]); put("m2w1", p["m2w1"])
    put("q1w", p["q1w"], nf)                                 # fold norm_fact here
    put("k1w", p["k1w"]); put("v1w", p["v1w"])
    put("q2w", p["q2w"], nf)
    put("k2w", p["k2w"]); put("v2w", p["v2w"])
    put("ww", p["ww"])

    # --- bias / BN slab (f32: the element-wise path stays f32) ---------------
    vec_np = np.zeros((_VEC_ROWS, f_pad), np.float32)
    vec_rows = [p["m1b0"], p["m1g"], p["m1bt"], p["m1b1"],
                p["m2b0"], p["m2g"], p["m2bt"], p["m2b1"],
                p["q1b"] * nf, p["k1b"], p["v1b"],
                p["q2b"] * nf, p["k2b"], p["v2b"], p["wb"]]
    for i, v in enumerate(vec_rows):
        v = np.asarray(v, np.float32)
        vec_np[i, :v.shape[0]] = v

    prep = {
        "w_slab": jnp.asarray(w_np, matmul_dtype),
        "vec_slab": jnp.asarray(vec_np, jnp.float32),
        # original-layout first-layer MLP weights (returned by the module)
        "m1w0_pt": jnp.asarray(p["m1w0"], jnp.float32),
        "m2w0_pt": jnp.asarray(p["m2w0"], jnp.float32),
    }
    return prep


# ---------------------------------------------------------------------------
# wrapper: single fused pallas_call (jitted so the output-slab split fuses in)
# ---------------------------------------------------------------------------
@functools.partial(jax.jit, static_argnames=("approx_recip",))
def cmff_forward(x1, x2, prep, approx_recip=True):
    n = x1.shape[0]
    hidden, input_dim1 = prep["m1w0_pt"].shape
    input_dim2 = prep["m2w0_pt"].shape[1]
    dim = hidden

    blocks, total_rows, f_pad = _weight_block_layout(input_dim1, input_dim2, dim)
    assert prep["w_slab"].shape == (total_rows, f_pad)
    assert prep["vec_slab"].shape == (_VEC_ROWS, f_pad)

    n_pad = _round_up(max(n, 1), 8)
    out_rows = n_pad + 2 * dim

    kernel = functools.partial(cmff_kernel, dim=dim, n_rows=n, n_pad=n_pad,
                               blocks=blocks, approx_recip=approx_recip)

    inputs = (x1, x2, prep["w_slab"], prep["vec_slab"])
    vmem = pl.BlockSpec(memory_space=pltpu.MemorySpace.VMEM)
    out_shape = jax.ShapeDtypeStruct((out_rows, f_pad), jnp.float32)

    # generation-aware VMEM budget: fail loudly at compile time rather than
    # silently spill (v7x has only 64 MiB physical VMEM per TensorCore).
    operand_bytes = sum(math.prod(a.shape) * a.dtype.itemsize for a in inputs)
    out_bytes = math.prod(out_shape.shape) * 4
    capacity = _vmem_capacity_bytes()
    vmem_limit = int(min(max(4 * (operand_bytes + out_bytes) + (2 << 20), 8 << 20),
                         capacity // 2))

    slab = pl.pallas_call(
        kernel,
        out_shape=out_shape,
        in_specs=[vmem] * len(inputs),
        out_specs=vmem,
        compiler_params=pltpu.CompilerParams(vmem_limit_bytes=vmem_limit),
    )(*inputs)

    output = slab[:n, :dim]
    atten1 = slab[n_pad:n_pad + dim, :dim]
    atten2 = slab[n_pad + dim:n_pad + 2 * dim, :dim]
    # module also returns the first-layer MLP weights (PyTorch (out, in) layout)
    return output, atten1, atten2, prep["m1w0_pt"], prep["m2w0_pt"]


# ---------------------------------------------------------------------------
# pure-JAX reference (mirrors the PyTorch forward; matmul precision selectable)
# ---------------------------------------------------------------------------
def cmff_reference(x1, x2, params, matmul_dtype=jnp.float32):
    f32 = jnp.float32

    def dot(a, b):
        return jnp.dot(a.astype(matmul_dtype), b.astype(matmul_dtype),
                       preferred_element_type=f32)

    def linear(x, w, b):
        return dot(x, w.T) + b

    def mlp(x, w0, b0, g, bt, w1, b1):
        h = jnp.maximum(linear(x, w0, b0), 0.0)
        mean = jnp.mean(h, axis=0, keepdims=True)
        var = jnp.mean((h - mean) ** 2, axis=0, keepdims=True)
        h = (h - mean) / jnp.sqrt(var + BN_EPS) * g + bt
        return linear(h, w1, b1)

    p = params
    h1 = mlp(x1, p["m1w0"], p["m1b0"], p["m1g"], p["m1bt"], p["m1w1"], p["m1b1"])
    h2 = mlp(x2, p["m2w0"], p["m2b0"], p["m2g"], p["m2bt"], p["m2w1"], p["m2b1"])
    Q1, K1, V1 = (linear(h1, p[a + "1w"], p[a + "1b"]) for a in ("q", "k", "v"))
    Q2, K2, V2 = (linear(h2, p[a + "2w"], p[a + "2b"]) for a in ("q", "k", "v"))
    nf = 1.0 / math.sqrt(p["q1w"].shape[0])
    sm0 = lambda s: jax.nn.softmax(s, axis=0)
    atten1 = sm0(dot(Q1.T, K1) * nf) + sm0(dot(Q2.T, K1) * nf)
    atten2 = sm0(dot(Q1.T, K2) * nf) + sm0(dot(Q2.T, K2) * nf)
    output = linear(dot(V1, atten1) + dot(V2, atten2), p["ww"], p["wb"])
    return output, atten1, atten2


if __name__ == "__main__":
    # small shapes consistent with the module:
    # x1: (batch, input_dim1), x2: (batch, input_dim2)
    # NOTE: the PyTorch forward only type-checks when dim_k == dim_v == hidden.
    batch, input_dim1, input_dim2 = 8, 16, 24
    hidden = dim_k = dim_v = 32

    key = jax.random.PRNGKey(0)
    kx1, kx2, kp = jax.random.split(key, 3)
    x1 = jax.random.normal(kx1, (batch, input_dim1), dtype=jnp.float32)
    x2 = jax.random.normal(kx2, (batch, input_dim2), dtype=jnp.float32)
    params = init_cmff_params(kp, input_dim1, input_dim2, hidden, dim_k, dim_v)

    # --- strict numerical check: f32 MXU operands, exact reciprocal ---------
    prep_f32 = prepare_cmff_params(params, matmul_dtype=jnp.float32)
    out, a1, a2, w1, w2 = cmff_forward(x1, x2, prep_f32, approx_recip=False)
    jax.block_until_ready((out, a1, a2))
    r_out, r_a1, r_a2 = cmff_reference(x1, x2, params, matmul_dtype=jnp.float32)
    np.testing.assert_allclose(np.asarray(out), np.asarray(r_out), rtol=1e-4, atol=1e-4)
    np.testing.assert_allclose(np.asarray(a1), np.asarray(r_a1), rtol=1e-4, atol=1e-4)
    np.testing.assert_allclose(np.asarray(a2), np.asarray(r_a2), rtol=1e-4, atol=1e-4)
    assert w1.shape == (hidden, input_dim1) and w2.shape == (hidden, input_dim2)

    # --- performance config: per-generation matmul dtype + approx reciprocal
    # (compared against a reference that uses the same matmul operand dtype;
    #  looser bound for bf16 since norm_fact is folded pre-quantization)
    prep_perf = prepare_cmff_params(params)          # f32 on v5e, bf16 on v6e/v7x
    mm_dt = prep_perf["w_slab"].dtype
    out_p, a1_p, a2_p, _, _ = cmff_forward(x1, x2, prep_perf, approx_recip=True)
    jax.block_until_ready((out_p, a1_p, a2_p))
    p_out, p_a1, p_a2 = cmff_reference(x1, x2, params, matmul_dtype=mm_dt)
    tol = 2e-2 if mm_dt.itemsize == 2 else 5e-3
    np.testing.assert_allclose(np.asarray(out_p), np.asarray(p_out), rtol=tol, atol=tol)
    np.testing.assert_allclose(np.asarray(a1_p), np.asarray(p_a1), rtol=tol, atol=tol)
    np.testing.assert_allclose(np.asarray(a2_p), np.asarray(p_a2), rtol=tol, atol=tol)

    print("KERNEL_OK")
</pallas_src>

<mosaic_0001>
module attributes {stable_mosaic.version = 11 : i64} {
  func.func @cmff_kernel(%arg0: memref<8x16xf32, #tpu.memory_space<vmem>>, %arg1: memref<8x24xf32, #tpu.memory_space<vmem>>, %arg2: memref<352x128xf32, #tpu.memory_space<vmem>>, %arg3: memref<16x128xf32, #tpu.memory_space<vmem>>, %arg4: memref<72x128xf32, #tpu.memory_space<vmem>>) attributes {dimension_semantics = [], scalar_prefetch = 0 : i64, scratch_operands = 0 : i64, tpu.core_type = #tpu.core_type<tc>} {
    %c0 = arith.constant 0 : index
    %c0_0 = arith.constant 0 : index
    %0 = vector.load %arg3[%c0, %c0_0] : memref<16x128xf32, #tpu.memory_space<vmem>>, vector<16x128xf32>
    %c0_1 = arith.constant 0 : index
    %c0_2 = arith.constant 0 : index
    %1 = vector.load %arg0[%c0_1, %c0_2] : memref<8x16xf32, #tpu.memory_space<vmem>>, vector<8x16xf32>
    %c0_3 = arith.constant 0 : index
    %c0_4 = arith.constant 0 : index
    %2 = vector.load %arg1[%c0_3, %c0_4] : memref<8x24xf32, #tpu.memory_space<vmem>>, vector<8x24xf32>
    %c0_5 = arith.constant 0 : index
    %c0_6 = arith.constant 0 : index
    %3 = vector.load %arg2[%c0_5, %c0_6] : memref<352x128xf32, #tpu.memory_space<vmem>>, vector<16x128xf32>
    %cst = arith.constant dense<0.000000e+00> : vector<8x128xf32>
    %4 = tpu.matmul %1, %3, %cst {dimension_numbers = #tpu.dot_dimension_numbers<[1], [0], [0], [1], [0, 0, 1, 1], [], []>} : vector<8x16xf32>, vector<16x128xf32>, vector<8x128xf32> -> vector<8x128xf32>
    %5 = vector.extract_strided_slice %0 {offsets = [0, 0], sizes = [1, 128], strides = [1, 1]} : vector<16x128xf32> to vector<1x128xf32>
    %6 = vector.broadcast %5 : vector<1x128xf32> to vector<8x128xf32>
    %7 = arith.addf %4, %6 : vector<8x128xf32>
    %cst_7 = arith.constant 0.000000e+00 : f32
    %8 = vector.broadcast %cst_7 : f32 to vector<8x128xf32>
    %9 = arith.maximumf %7, %8 : vector<8x128xf32>
    %cst_8 = arith.constant dense<0.000000e+00> : vector<128xf32>
    %10 = vector.multi_reduction <add>, %9, %cst_8 [0] : vector<8x128xf32> to vector<128xf32>
    %11 = vector.shape_cast %10 : vector<128xf32> to vector<1x128xf32>
    %cst_9 = arith.constant 8.000000e+00 : f32
    %12 = vector.broadcast %cst_9 : f32 to vector<1x128xf32>
    %13 = arith.divf %11, %12 : vector<1x128xf32>
    %14 = vector.broadcast %13 : vector<1x128xf32> to vector<8x128xf32>
    %15 = arith.subf %9, %14 : vector<8x128xf32>
    %16 = arith.mulf %15, %15 : vector<8x128xf32>
    %cst_10 = arith.constant dense<0.000000e+00> : vector<128xf32>
    %17 = vector.multi_reduction <add>, %16, %cst_10 [0] : vector<8x128xf32> to vector<128xf32>
    %18 = vector.shape_cast %17 : vector<128xf32> to vector<1x128xf32>
    %cst_11 = arith.constant 8.000000e+00 : f32
    %19 = vector.broadcast %cst_11 : f32 to vector<1x128xf32>
    %20 = arith.divf %18, %19 : vector<1x128xf32>
    %21 = vector.broadcast %13 : vector<1x128xf32> to vector<8x128xf32>
    %22 = arith.subf %9, %21 : vector<8x128xf32>
    %cst_12 = arith.constant 9.99999974E-6 : f32
    %23 = vector.broadcast %cst_12 : f32 to vector<1x128xf32>
    %24 = arith.addf %20, %23 : vector<1x128xf32>
    %25 = math.rsqrt %24 : vector<1x128xf32>
    %26 = vector.broadcast %25 : vector<1x128xf32> to vector<8x128xf32>
    %27 = arith.mulf %22, %26 : vector<8x128xf32>
    %28 = vector.extract_strided_slice %0 {offsets = [1, 0], sizes = [1, 128], strides = [1, 1]} : vector<16x128xf32> to vector<1x128xf32>
    %29 = vector.broadcast %28 : vector<1x128xf32> to vector<8x128xf32>
    %30 = arith.mulf %27, %29 : vector<8x128xf32>
    %31 = vector.extract_strided_slice %0 {offsets = [2, 0], sizes = [1, 128], strides = [1, 1]} : vector<16x128xf32> to vector<1x128xf32>
    %32 = vector.broadcast %31 : vector<1x128xf32> to vector<8x128xf32>
    %33 = arith.addf %30, %32 : vector<8x128xf32>
    %34 = vector.extract_strided_slice %33 {offsets = [0, 0], sizes = [8, 32], strides = [1, 1]} : vector<8x128xf32> to vector<8x32xf32>
    %c32 = arith.constant 32 : index
    %c0_13 = arith.constant 0 : index
    %35 = vector.load %arg2[%c32, %c0_13] : memref<352x128xf32, #tpu.memory_space<vmem>>, vector<32x128xf32>
    %cst_14 = arith.constant dense<0.000000e+00> : vector<8x128xf32>
    %36 = tpu.matmul %34, %35, %cst_14 {dimension_numbers = #tpu.dot_dimension_numbers<[1], [0], [0], [1], [0, 0, 1, 1], [], []>} : vector<8x32xf32>, vector<32x128xf32>, vector<8x128xf32> -> vector<8x128xf32>
    %37 = vector.extract_strided_slice %0 {offsets = [3, 0], sizes = [1, 128], strides = [1, 1]} : vector<16x128xf32> to vector<1x128xf32>
    %38 = vector.broadcast %37 : vector<1x128xf32> to vector<8x128xf32>
    %39 = arith.addf %36, %38 : vector<8x128xf32>
    %c64 = arith.constant 64 : index
    %c0_15 = arith.constant 0 : index
    %40 = vector.load %arg2[%c64, %c0_15] : memref<352x128xf32, #tpu.memory_space<vmem>>, vector<24x128xf32>
    %cst_16 = arith.constant dense<0.000000e+00> : vector<8x128xf32>
    %41 = tpu.matmul %2, %40, %cst_16 {dimension_numbers = #tpu.dot_dimension_numbers<[1], [0], [0], [1], [0, 0, 1, 1], [], []>} : vector<8x24xf32>, vector<24x128xf32>, vector<8x128xf32> -> vector<8x128xf32>
    %42 = vector.extract_strided_slice %0 {offsets = [4, 0], sizes = [1, 128], strides = [1, 1]} : vector<16x128xf32> to vector<1x128xf32>
    %43 = vector.broadcast %42 : vector<1x128xf32> to vector<8x128xf32>
    %44 = arith.addf %41, %43 : vector<8x128xf32>
    %cst_17 = arith.constant 0.000000e+00 : f32
    %45 = vector.broadcast %cst_17 : f32 to vector<8x128xf32>
    %46 = arith.maximumf %44, %45 : vector<8x128xf32>
    %cst_18 = arith.constant dense<0.000000e+00> : vector<128xf32>
    %47 = vector.multi_reduction <add>, %46, %cst_18 [0] : vector<8x128xf32> to vector<128xf32>
    %48 = vector.shape_cast %47 : vector<128xf32> to vector<1x128xf32>
    %cst_19 = arith.constant 8.000000e+00 : f32
    %49 = vector.broadcast %cst_19 : f32 to vector<1x128xf32>
    %50 = arith.divf %48, %49 : vector<1x128xf32>
    %51 = vector.broadcast %50 : vector<1x128xf32> to vector<8x128xf32>
    %52 = arith.subf %46, %51 : vector<8x128xf32>
    %53 = arith.mulf %52, %52 : vector<8x128xf32>
    %cst_20 = arith.constant dense<0.000000e+00> : vector<128xf32>
    %54 = vector.multi_reduction <add>, %53, %cst_20 [0] : vector<8x128xf32> to vector<128xf32>
    %55 = vector.shape_cast %54 : vector<128xf32> to vector<1x128xf32>
    %cst_21 = arith.constant 8.000000e+00 : f32
    %56 = vector.broadcast %cst_21 : f32 to vector<1x128xf32>
    %57 = arith.divf %55, %56 : vector<1x128xf32>
    %58 = vector.broadcast %50 : vector<1x128xf32> to vector<8x128xf32>
    %59 = arith.subf %46, %58 : vector<8x128xf32>
    %cst_22 = arith.constant 9.99999974E-6 : f32
    %60 = vector.broadcast %cst_22 : f32 to vector<1x128xf32>
    %61 = arith.addf %57, %60 : vector<1x128xf32>
    %62 = math.rsqrt %61 : vector<1x128xf32>
    %63 = vector.broadcast %62 : vector<1x128xf32> to vector<8x128xf32>
    %64 = arith.mulf %59, %63 : vector<8x128xf32>
    %65 = vector.extract_strided_slice %0 {offsets = [5, 0], sizes = [1, 128], strides = [1, 1]} : vector<16x128xf32> to vector<1x128xf32>
    %66 = vector.broadcast %65 : vector<1x128xf32> to vector<8x128xf32>
    %67 = arith.mulf %64, %66 : vector<8x128xf32>
    %68 = vector.extract_strided_slice %0 {offsets = [6, 0], sizes = [1, 128], strides = [1, 1]} : vector<16x128xf32> to vector<1x128xf32>
    %69 = vector.broadcast %68 : vector<1x128xf32> to vector<8x128xf32>
    %70 = arith.addf %67, %69 : vector<8x128xf32>
    %71 = vector.extract_strided_slice %70 {offsets = [0, 0], sizes = [8, 32], strides = [1, 1]} : vector<8x128xf32> to vector<8x32xf32>
    %c96 = arith.constant 96 : index
    %c0_23 = arith.constant 0 : index
    %72 = vector.load %arg2[%c96, %c0_23] : memref<352x128xf32, #tpu.memory_space<vmem>>, vector<32x128xf32>
    %cst_24 = arith.constant dense<0.000000e+00> : vector<8x128xf32>
    %73 = tpu.matmul %71, %72, %cst_24 {dimension_numbers = #tpu.dot_dimension_numbers<[1], [0], [0], [1], [0, 0, 1, 1], [], []>} : vector<8x32xf32>, vector<32x128xf32>, vector<8x128xf32> -> vector<8x128xf32>
    %74 = vector.extract_strided_slice %0 {offsets = [7, 0], sizes = [1, 128], strides = [1, 1]} : vector<16x128xf32> to vector<1x128xf32>
    %75 = vector.broadcast %74 : vector<1x128xf32> to vector<8x128xf32>
    %76 = arith.addf %73, %75 : vector<8x128xf32>
    %77 = vector.extract_strided_slice %39 {offsets = [0, 0], sizes = [8, 32], strides = [1, 1]} : vector<8x128xf32> to vector<8x32xf32>
    %78 = vector.extract_strided_slice %76 {offsets = [0, 0], sizes = [8, 32], strides = [1, 1]} : vector<8x128xf32> to vector<8x32xf32>
    %c128 = arith.constant 128 : index
    %c0_25 = arith.constant 0 : index
    %79 = vector.load %arg2[%c128, %c0_25] : memref<352x128xf32, #tpu.memory_space<vmem>>, vector<32x128xf32>
    %cst_26 = arith.constant dense<0.000000e+00> : vector<8x128xf32>
    %80 = tpu.matmul %77, %79, %cst_26 {dimension_numbers = #tpu.dot_dimension_numbers<[1], [0], [0], [1], [0, 0, 1, 1], [], []>} : vector<8x32xf32>, vector<32x128xf32>, vector<8x128xf32> -> vector<8x128xf32>
    %81 = vector.extract_strided_slice %0 {offsets = [8, 0], sizes = [1, 128], strides = [1, 1]} : vector<16x128xf32> to vector<1x128xf32>
    %82 = vector.broadcast %81 : vector<1x128xf32> to vector<8x128xf32>
    %83 = arith.addf %80, %82 : vector<8x128xf32>
    %c160 = arith.constant 160 : index
    %c0_27 = arith.constant 0 : index
    %84 = vector.load %arg2[%c160, %c0_27] : memref<352x128xf32, #tpu.memory_space<vmem>>, vector<32x128xf32>
    %cst_28 = arith.constant dense<0.000000e+00> : vector<8x128xf32>
    %85 = tpu.matmul %77, %84, %cst_28 {dimension_numbers = #tpu.dot_dimension_numbers<[1], [0], [0], [1], [0, 0, 1, 1], [], []>} : vector<8x32xf32>, vector<32x128xf32>, vector<8x128xf32> -> vector<8x128xf32>
    %86 = vector.extract_strided_slice %0 {offsets = [9, 0], sizes = [1, 128], strides = [1, 1]} : vector<16x128xf32> to vector<1x128xf32>
    %87 = vector.broadcast %86 : vector<1x128xf32> to vector<8x128xf32>
    %88 = arith.addf %85, %87 : vector<8x128xf32>
    %c192 = arith.constant 192 : index
    %c0_29 = arith.constant 0 : index
    %89 = vector.load %arg2[%c192, %c0_29] : memref<352x128xf32, #tpu.memory_space<vmem>>, vector<32x128xf32>
    %cst_30 = arith.constant dense<0.000000e+00> : vector<8x128xf32>
    %90 = tpu.matmul %77, %89, %cst_30 {dimension_numbers = #tpu.dot_dimension_numbers<[1], [0], [0], [1], [0, 0, 1, 1], [], []>} : vector<8x32xf32>, vector<32x128xf32>, vector<8x128xf32> -> vector<8x128xf32>
    %91 = vector.extract_strided_slice %0 {offsets = [10, 0], sizes = [1, 128], strides = [1, 1]} : vector<16x128xf32> to vector<1x128xf32>
    %92 = vector.broadcast %91 : vector<1x128xf32> to vector<8x128xf32>
    %93 = arith.addf %90, %92 : vector<8x128xf32>
    %c224 = arith.constant 224 : index
    %c0_31 = arith.constant 0 : index
    %94 = vector.load %arg2[%c224, %c0_31] : memref<352x128xf32, #tpu.memory_space<vmem>>, vector<32x128xf32>
    %cst_32 = arith.constant dense<0.000000e+00> : vector<8x128xf32>
    %95 = tpu.matmul %78, %94, %cst_32 {dimension_numbers = #tpu.dot_dimension_numbers<[1], [0], [0], [1], [0, 0, 1, 1], [], []>} : vector<8x32xf32>, vector<32x128xf32>, vector<8x128xf32> -> vector<8x128xf32>
    %96 = vector.extract_strided_slice %0 {offsets = [11, 0], sizes = [1, 128], strides = [1, 1]} : vector<16x128xf32> to vector<1x128xf32>
    %97 = vector.broadcast %96 : vector<1x128xf32> to vector<8x128xf32>
    %98 = arith.addf %95, %97 : vector<8x128xf32>
    %c256 = arith.constant 256 : index
    %c0_33 = arith.constant 0 : index
    %99 = vector.load %arg2[%c256, %c0_33] : memref<352x128xf32, #tpu.memory_space<vmem>>, vector<32x128xf32>
    %cst_34 = arith.constant dense<0.000000e+00> : vector<8x128xf32>
    %100 = tpu.matmul %78, %99, %cst_34 {dimension_numbers = #tpu.dot_dimension_numbers<[1], [0], [0], [1], [0, 0, 1, 1], [], []>} : vector<8x32xf32>, vector<32x128xf32>, vector<8x128xf32> -> vector<8x128xf32>
    %101 = vector.extract_strided_slice %0 {offsets = [12, 0], sizes = [1, 128], strides = [1, 1]} : vector<16x128xf32> to vector<1x128xf32>
    %102 = vector.broadcast %101 : vector<1x128xf32> to vector<8x128xf32>
    %103 = arith.addf %100, %102 : vector<8x128xf32>
    %c288 = arith.constant 288 : index
    %c0_35 = arith.constant 0 : index
    %104 = vector.load %arg2[%c288, %c0_35] : memref<352x128xf32, #tpu.memory_space<vmem>>, vector<32x128xf32>
    %cst_36 = arith.constant dense<0.000000e+00> : vector<8x128xf32>
    %105 = tpu.matmul %78, %104, %cst_36 {dimension_numbers = #tpu.dot_dimension_numbers<[1], [0], [0], [1], [0, 0, 1, 1], [], []>} : vector<8x32xf32>, vector<32x128xf32>, vector<8x128xf32> -> vector<8x128xf32>
    %106 = vector.extract_strided_slice %0 {offsets = [13, 0], sizes = [1, 128], strides = [1, 1]} : vector<16x128xf32> to vector<1x128xf32>
    %107 = vector.broadcast %106 : vector<1x128xf32> to vector<8x128xf32>
    %108 = arith.addf %105, %107 : vector<8x128xf32>
    %109 = vector.extract_strided_slice %83 {offsets = [0, 0], sizes = [8, 32], strides = [1, 1]} : vector<8x128xf32> to vector<8x32xf32>
    %110 = vector.extract_strided_slice %98 {offsets = [0, 0], sizes = [8, 32], strides = [1, 1]} : vector<8x128xf32> to vector<8x32xf32>
    %cst_37 = arith.constant dense<0.000000e+00> : vector<32x128xf32>
    %111 = tpu.matmul %109, %88, %cst_37 {dimension_numbers = #tpu.dot_dimension_numbers<[0], [0], [1], [1], [0, 1, 1, 1], [], []>} : vector<8x32xf32>, vector<8x128xf32>, vector<32x128xf32> -> vector<32x128xf32>
    %cst_38 = arith.constant dense<0xFF800000> : vector<128xf32>
    %112 = vector.multi_reduction <maximumf>, %111, %cst_38 [0] : vector<32x128xf32> to vector<128xf32>
    %113 = vector.shape_cast %112 : vector<128xf32> to vector<1x128xf32>
    %114 = vector.broadcast %113 : vector<1x128xf32> to vector<32x128xf32>
    %115 = arith.subf %111, %114 : vector<32x128xf32>
    %116 = math.exp %115 : vector<32x128xf32>
    %cst_39 = arith.constant dense<0.000000e+00> : vector<128xf32>
    %117 = vector.multi_reduction <add>, %116, %cst_39 [0] : vector<32x128xf32> to vector<128xf32>
    %118 = vector.shape_cast %117 : vector<128xf32> to vector<1x128xf32>
    %119 = tpu.reciprocal %118 : vector<1x128xf32> -> vector<1x128xf32>
    %120 = vector.broadcast %119 : vector<1x128xf32> to vector<32x128xf32>
    %121 = arith.mulf %116, %120 : vector<32x128xf32>
    %cst_40 = arith.constant dense<0.000000e+00> : vector<32x128xf32>
    %122 = tpu.matmul %110, %88, %cst_40 {dimension_numbers = #tpu.dot_dimension_numbers<[0], [0], [1], [1], [0, 1, 1, 1], [], []>} : vector<8x32xf32>, vector<8x128xf32>, vector<32x128xf32> -> vector<32x128xf32>
    %cst_41 = arith.constant dense<0xFF800000> : vector<128xf32>
    %123 = vector.multi_reduction <maximumf>, %122, %cst_41 [0] : vector<32x128xf32> to vector<128xf32>
    %124 = vector.shape_cast %123 : vector<128xf32> to vector<1x128xf32>
    %125 = vector.broadcast %124 : vector<1x128xf32> to vector<32x128xf32>
    %126 = arith.subf %122, %125 : vector<32x128xf32>
    %127 = math.exp %126 : vector<32x128xf32>
    %cst_42 = arith.constant dense<0.000000e+00> : vector<128xf32>
    %128 = vector.multi_reduction <add>, %127, %cst_42 [0] : vector<32x128xf32> to vector<128xf32>
    %129 = vector.shape_cast %128 : vector<128xf32> to vector<1x128xf32>
    %130 = tpu.reciprocal %129 : vector<1x128xf32> -> vector<1x128xf32>
    %131 = vector.broadcast %130 : vector<1x128xf32> to vector<32x128xf32>
    %132 = arith.mulf %127, %131 : vector<32x128xf32>
    %133 = arith.addf %121, %132 : vector<32x128xf32>
    %cst_43 = arith.constant dense<0.000000e+00> : vector<32x128xf32>
    %134 = tpu.matmul %109, %103, %cst_43 {dimension_numbers = #tpu.dot_dimension_numbers<[0], [0], [1], [1], [0, 1, 1, 1], [], []>} : vector<8x32xf32>, vector<8x128xf32>, vector<32x128xf32> -> vector<32x128xf32>
    %cst_44 = arith.constant dense<0xFF800000> : vector<128xf32>
    %135 = vector.multi_reduction <maximumf>, %134, %cst_44 [0] : vector<32x128xf32> to vector<128xf32>
    %136 = vector.shape_cast %135 : vector<128xf32> to vector<1x128xf32>
    %137 = vector.broadcast %136 : vector<1x128xf32> to vector<32x128xf32>
    %138 = arith.subf %134, %137 : vector<32x128xf32>
    %139 = math.exp %138 : vector<32x128xf32>
    %cst_45 = arith.constant dense<0.000000e+00> : vector<128xf32>
    %140 = vector.multi_reduction <add>, %139, %cst_45 [0] : vector<32x128xf32> to vector<128xf32>
    %141 = vector.shape_cast %140 : vector<128xf32> to vector<1x128xf32>
    %142 = tpu.reciprocal %141 : vector<1x128xf32> -> vector<1x128xf32>
    %143 = vector.broadcast %142 : vector<1x128xf32> to vector<32x128xf32>
    %144 = arith.mulf %139, %143 : vector<32x128xf32>
    %cst_46 = arith.constant dense<0.000000e+00> : vector<32x128xf32>
    %145 = tpu.matmul %110, %103, %cst_46 {dimension_numbers = #tpu.dot_dimension_numbers<[0], [0], [1], [1], [0, 1, 1, 1], [], []>} : vector<8x32xf32>, vector<8x128xf32>, vector<32x128xf32> -> vector<32x128xf32>
    %cst_47 = arith.constant dense<0xFF800000> : vector<128xf32>
    %146 = vector.multi_reduction <maximumf>, %145, %cst_47 [0] : vector<32x128xf32> to vector<128xf32>
    %147 = vector.shape_cast %146 : vector<128xf32> to vector<1x128xf32>
    %148 = vector.broadcast %147 : vector<1x128xf32> to vector<32x128xf32>
    %149 = arith.subf %145, %148 : vector<32x128xf32>
    %150 = math.exp %149 : vector<32x128xf32>
    %cst_48 = arith.constant dense<0.000000e+00> : vector<128xf32>
    %151 = vector.multi_reduction <add>, %150, %cst_48 [0] : vector<32x128xf32> to vector<128xf32>
    %152 = vector.shape_cast %151 : vector<128xf32> to vector<1x128xf32>
    %153 = tpu.reciprocal %152 : vector<1x128xf32> -> vector<1x128xf32>
    %154 = vector.broadcast %153 : vector<1x128xf32> to vector<32x128xf32>
    %155 = arith.mulf %150, %154 : vector<32x128xf32>
    %156 = arith.addf %144, %155 : vector<32x128xf32>
    %157 = vector.extract_strided_slice %93 {offsets = [0, 0], sizes = [8, 32], strides = [1, 1]} : vector<8x128xf32> to vector<8x32xf32>
    %158 = vector.extract_strided_slice %108 {offsets = [0, 0], sizes = [8, 32], strides = [1, 1]} : vector<8x128xf32> to vector<8x32xf32>
    %cst_49 = arith.constant dense<0.000000e+00> : vector<8x128xf32>
    %159 = tpu.matmul %157, %133, %cst_49 {dimension_numbers = #tpu.dot_dimension_numbers<[1], [0], [0], [1], [0, 0, 1, 1], [], []>} : vector<8x32xf32>, vector<32x128xf32>, vector<8x128xf32> -> vector<8x128xf32>
    %cst_50 = arith.constant dense<0.000000e+00> : vector<8x128xf32>
    %160 = tpu.matmul %158, %156, %cst_50 {dimension_numbers = #tpu.dot_dimension_numbers<[1], [0], [0], [1], [0, 0, 1, 1], [], []>} : vector<8x32xf32>, vector<32x128xf32>, vector<8x128xf32> -> vector<8x128xf32>
    %161 = arith.addf %159, %160 : vector<8x128xf32>
    %162 = vector.extract_strided_slice %161 {offsets = [0, 0], sizes = [8, 32], strides = [1, 1]} : vector<8x128xf32> to vector<8x32xf32>
    %c320 = arith.constant 320 : index
    %c0_51 = arith.constant 0 : index
    %163 = vector.load %arg2[%c320, %c0_51] : memref<352x128xf32, #tpu.memory_space<vmem>>, vector<32x128xf32>
    %cst_52 = arith.constant dense<0.000000e+00> : vector<8x128xf32>
    %164 = tpu.matmul %162, %163, %cst_52 {dimension_numbers = #tpu.dot_dimension_numbers<[1], [0], [0], [1], [0, 0, 1, 1], [], []>} : vector<8x32xf32>, vector<32x128xf32>, vector<8x128xf32> -> vector<8x128xf32>
    %165 = vector.extract_strided_slice %0 {offsets = [14, 0], sizes = [1, 128], strides = [1, 1]} : vector<16x128xf32> to vector<1x128xf32>
    %166 = vector.broadcast %165 : vector<1x128xf32> to vector<8x128xf32>
    %167 = arith.addf %164, %166 : vector<8x128xf32>
    %c0_53 = arith.constant 0 : index
    %c0_54 = arith.constant 0 : index
    %168 = vector.load %arg4[%c0_53, %c0_54] : memref<72x128xf32, #tpu.memory_space<vmem>>, vector<8x128xf32>
    tpu.vector_store %arg4[%c0_53, %c0_54], %167 {strides = array<i32>} : memref<72x128xf32, #tpu.memory_space<vmem>>, vector<8x128xf32>,
    %c8 = arith.constant 8 : index
    %c0_55 = arith.constant 0 : index
    %169 = vector.load %arg4[%c8, %c0_55] : memref<72x128xf32, #tpu.memory_space<vmem>>, vector<32x128xf32>
    tpu.vector_store %arg4[%c8, %c0_55], %133 {strides = array<i32>} : memref<72x128xf32, #tpu.memory_space<vmem>>, vector<32x128xf32>,
    %c40 = arith.constant 40 : index
    %c0_56 = arith.constant 0 : index
    %170 = vector.load %arg4[%c40, %c0_56] : memref<72x128xf32, #tpu.memory_space<vmem>>, vector<32x128xf32>
    tpu.vector_store %arg4[%c40, %c0_56], %156 {strides = array<i32>} : memref<72x128xf32, #tpu.memory_space<vmem>>, vector<32x128xf32>,
    return
  }
}

</mosaic_0001>

<llo_original>
// kernel: cmff_forward.1
$region0: #{cmff_forward.1}
  #allocation0 [shape = 'u32[]', space=smem, size = 0x4, offset = 0x4, fixed_abs, tag = 'smem constant byte address 0x4 - core index']
  #allocation1 [shape = 'u32[72,128]{1,0:T(1,128)}', space=vmem, size = 0x9000, scoped, tag = 'internal scratch']
  %s0 = inlined_call_operand.hbm [shape: f32[8,16], index: 0, kind: input, shape index: {}]
  %s1 = inlined_call_operand.hbm [shape: f32[8,24], index: 1, kind: input, shape index: {}]
  %s2 = inlined_call_operand.hbm [shape: f32[352,128], index: 2, kind: input, shape index: {}]
  %s3 = inlined_call_operand.hbm [shape: f32[16,128], index: 3, kind: input, shape index: {}]
  %s4 = inlined_call_operand.vmem [shape: f32[72,128], index: 4, kind: output, shape index: {}]
  %s5 = sld [smem:[#allocation0]]
  $region42: #{cmff_forward.1} parent=0
    _
  %s7 = ssub.s32 1, %s5
  %s8 = scalar_select 0, %s7, %s5
  $region1: #{cmff_forward.1} parent=0
    #allocation2 [shape = 'u8[4096]{0}', space=vmem, size = 0x1000, scoped, tag = 'input window, operand 0, single buffered']
    #allocation3 [shape = 's32[1]{0}', space=sflag, size = 0x4, scoped, tag = 'scoped memory for cmff_forward.1']
    #allocation4 [shape = 'u8[4096]{0}', space=vmem, size = 0x1000, scoped, tag = 'input window, operand 1, single buffered']
    #allocation5 [shape = 's32[1]{0}', space=sflag, size = 0x4, scoped, tag = 'scoped memory for cmff_forward.1']
    #allocation6 [shape = 'u8[180224]{0}', space=vmem, size = 0x2c000, scoped, tag = 'input window, operand 2, single buffered']
    #allocation7 [shape = 'u8[8192]{0}', space=vmem, size = 0x2000, scoped, tag = 'input window, operand 3, single buffered']
    #allocation8 [shape = 's32[1]{0}', space=sflag, size = 0x4, scoped, tag = 'scoped memory for cmff_forward.1']
    %9 = vsyncpa [#allocation3], 0
    %10 = vsyncpa [#allocation5], 0
    %11 = vsyncpa [#allocation8], 0
    // Predicated region
    $region2: #{cmff_forward.1} parent=1 // pred_check
      _
    $region3: #{cmff_forward.1} parent=1 // pred_check_branch
      %13 = sbr.rel (0) target = $region5
    $region4: #{cmff_forward.1} parent=1 // pred_region
      %15 = vsyncadd [#allocation3], 0
      %s17 = sshll.u32 %s0, 4
      %s18 = int_to_ptr.hbm [resolvable:$true] %s17
      %s19 = sshll.u32 [#allocation2], 4
      %s20 = int_to_ptr.vmem [resolvable:$true] %s19
      %22 = dma.hbm_to_vmem [thread:$0]  %s18, 128, %s20, [#allocation3]
    $region5: #{cmff_forward.1} parent=1 // pred_fallthru
      _
    // Predicated region
    $region6: #{cmff_forward.1} parent=1 // pred_check
      _
    $region7: #{cmff_forward.1} parent=1 // pred_check_branch
      %24 = sbr.rel (0) target = $region9
    $region8: #{cmff_forward.1} parent=1 // pred_region
      %26 = vsyncadd [#allocation5], 0
      %s28 = sshll.u32 %s1, 4
      %s29 = int_to_ptr.hbm [resolvable:$true] %s28
      %s30 = sshll.u32 [#allocation4], 4
      %s31 = int_to_ptr.vmem [resolvable:$true] %s30
      %33 = dma.hbm_to_vmem [thread:$0]  %s29, 128, %s31, [#allocation5]
    $region9: #{cmff_forward.1} parent=1 // pred_fallthru
      _
    // Predicated region
    $region10: #{cmff_forward.1} parent=1 // pred_check
      _
    $region11: #{cmff_forward.1} parent=1 // pred_check_branch
      %35 = sbr.rel (0) target = $region13
    $region12: #{cmff_forward.1} parent=1 // pred_region
      %37 = vsyncadd [#allocation5], 0
      %s38 = sshll.u32 %s2, 4
      %s39 = int_to_ptr.hbm [resolvable:$true] %s38
      %s40 = sshll.u32 [#allocation6], 4
      %s41 = int_to_ptr.vmem [resolvable:$true] %s40
      %46 = dma.hbm_to_vmem [thread:$0]  %s39, 5632, %s41, [#allocation5], 128, 128, 8
    $region13: #{cmff_forward.1} parent=1 // pred_fallthru
      _
    // Predicated region
    $region14: #{cmff_forward.1} parent=1 // pred_check
      _
    $region15: #{cmff_forward.1} parent=1 // pred_check_branch
      %48 = sbr.rel (0) target = $region17
    $region16: #{cmff_forward.1} parent=1 // pred_region
      %50 = vsyncadd [#allocation8], 0
      %s51 = sshll.u32 %s3, 4
      %s52 = int_to_ptr.hbm [resolvable:$true] %s51
      %s53 = sshll.u32 [#allocation7], 4
      %s54 = int_to_ptr.vmem [resolvable:$true] %s53
      %59 = dma.hbm_to_vmem [thread:$0]  %s52, 256, %s54, [#allocation8], 128, 128, 8
    $region17: #{cmff_forward.1} parent=1 // pred_fallthru
      _
    // Predicated region
    $region18: #{cmff_forward.1} parent=1 // pred_check
      _
    $region19: #{cmff_forward.1} parent=1 // pred_check_branch
      %61 = sbr.rel (0) target = $region21
    $region20: #{cmff_forward.1} parent=1 // pred_region
      %63 = dma.done [#allocation3], 128
    $region21: #{cmff_forward.1} parent=1 // pred_fallthru
      _
    // Predicated region
    $region22: #{cmff_forward.1} parent=1 // pred_check
      _
    $region23: #{cmff_forward.1} parent=1 // pred_check_branch
      %65 = sbr.rel (0) target = $region25
    $region24: #{cmff_forward.1} parent=1 // pred_region
      %67 = dma.done [#allocation5], 128
    $region25: #{cmff_forward.1} parent=1 // pred_fallthru
      _
    // Predicated region
    $region26: #{cmff_forward.1} parent=1 // pred_check
      _
    $region27: #{cmff_forward.1} parent=1 // pred_check_branch
      %69 = sbr.rel (0) target = $region29
    $region28: #{cmff_forward.1} parent=1 // pred_region
      %71 = dma.done [#allocation5], 5632
    $region29: #{cmff_forward.1} parent=1 // pred_fallthru
      _
    // Predicated region
    $region30: #{cmff_forward.1} parent=1 // pred_check
      _
    $region31: #{cmff_forward.1} parent=1 // pred_check_branch
      %73 = sbr.rel (0) target = $region33
    $region32: #{cmff_forward.1} parent=1 // pred_region
      %75 = dma.done [#allocation8], 256
    $region33: #{cmff_forward.1} parent=1 // pred_fallthru
      _
    %v76 = vld [vmem:[#allocation7] sm:$0xff]
    %v77 = vld [vmem:[#allocation7 + $0x8] sm:$0xff]
    %v78 = vld [vmem:[#allocation2] sm:$0xff]
    %v79 = vld [vmem:[#allocation4] sm:$0xff]
    %v80 = vld [vmem:[#allocation6] sm:$0xff]
    %v81 = vld [vmem:[#allocation6 + $0x8] sm:$0xff]
    %v82 = vperm.slane %v76, 0
    %vm83 = vcmask 130048
    %v85 = vsel %vm83, %v78, 0
    %87 = vmatpush.msra.mxu0 0.0
    %88 = vmatpush.msra.mxu0 0.0
    %89 = vmatpush.msra.mxu0 0.0
    %90 = vmatpush.msra.mxu0 0.0
    %91 = vmatpush.msra.mxu0 0.0
    %92 = vmatpush.msra.mxu0 0.0
    %93 = vmatpush.msra.mxu0 0.0
    %94 = vmatpush.msra.mxu0 0.0
    %95 = vmatpush.msra.mxu0 0.0
    %96 = vmatpush.msra.mxu0 0.0
    %97 = vmatpush.msra.mxu0 0.0
    %98 = vmatpush.msra.mxu0 0.0
    %99 = vmatpush.msra.mxu0 0.0
    %100 = vmatpush.msra.mxu0 0.0
    %101 = vmatpush.msra.mxu0 %v81
    %102 = vmatpush.msra.mxu0 %v80
    %103 = vmatmul.f32.gmra.mxu0 %v85
    %v104 = vpop.f32.mrf.mxu0
    %v105 = vadd.f32 %v82, %v104
    %106 = vdwg.mxu0
    %v107 = vmax.f32 %v105, 0.0
    %v108 = vrot.slane %v107, 4
    %v109 = vadd.f32 %v107, %v108
    %v110 = vrot.slane %v109, 2
    %v111 = vadd.f32 %v109, %v110
    %v112 = vrot.slane %v111, 1
    %v113 = vadd.f32 %v111, %v112
    %v114 = vrcp.pop 8.0
    %v115 = vmul.f32 8.0, %v114
    %v116 = vsub.f32 1.0, %v115
    %v117 = vmul.f32 %v114, %v116
    %v118 = vadd.f32 %v114, %v117
    %vm119 = vweird.f32 %v114
    %v120 = vsel %vm119, %v114, %v118
    %v121 = vmul.f32 %v113, %v120
    %v122 = vsub.f32 %v107, %v121
    %v123 = vmul.f32 %v122, %v122
    %v124 = vrot.slane %v123, 4
    %v125 = vadd.f32 %v123, %v124
    %v126 = vrot.slane %v125, 2
    %v127 = vadd.f32 %v125, %v126
    %v128 = vrot.slane %v127, 1
    %v129 = vadd.f32 %v127, %v128
    %v130 = vmul.f32 %v129, %v120
    %v131 = vadd.f32 %v130, 1e-05
    %v132 = vrsqrt.pop %v131
    %v133 = vmul.f32 %v132, %v131
    %v134 = vmul.f32 %v133, %v132
    %v135 = vmul.f32 0.5, %v134
    %v136 = vsub.f32 1.5, %v135
    %v137 = vmul.f32 %v132, %v136
    %vm138 = vweird.f32 %v131
    %vm139 = vweird.f32 %v132
    %vm140 = vmor %vm138, %vm139
    %v141 = vsel %vm140, %v132, %v137
    %v142 = vmul.f32 %v122, %v141
    %v143 = vperm.slane %v76, 1
    %v144 = vmul.f32 %v142, %v143
    %v145 = vperm.slane %v76, 2
    %v146 = vadd.f32 %v144, %v145
    %v147 = vld [vmem:[#allocation6 + $0x20] sm:$0xff]
    %v148 = vld [vmem:[#allocation6 + $0x28] sm:$0xff]
    %v149 = vld [vmem:[#allocation6 + $0x30] sm:$0xff]
    %v150 = vld [vmem:[#allocation6 + $0x38] sm:$0xff]
    %v151 = vperm.slane %v76, 3
    %vm152 = vcmask 261120
    %v154 = vsel %vm152, %v146, 0
    %156 = vmatpush.msra.mxu0 0.0
    %157 = vmatpush.msra.mxu0 0.0
    %158 = vmatpush.msra.mxu0 0.0
    %159 = vmatpush.msra.mxu0 0.0
    %160 = vmatpush.msra.mxu0 0.0
    %161 = vmatpush.msra.mxu0 0.0
    %162 = vmatpush.msra.mxu0 0.0
    %163 = vmatpush.msra.mxu0 0.0
    %164 = vmatpush.msra.mxu0 0.0
    %165 = vmatpush.msra.mxu0 0.0
    %166 = vmatpush.msra.mxu0 0.0
    %167 = vmatpush.msra.mxu0 0.0
    %168 = vmatpush.msra.mxu0 %v150
    %169 = vmatpush.msra.mxu0 %v149
    %170 = vmatpush.msra.mxu0 %v148
    %171 = vmatpush.msra.mxu0 %v147
    %172 = vmatmul.f32.gmra.mxu0 %v154
    %v173 = vpop.f32.mrf.mxu0
    %v174 = vadd.f32 %v151, %v173
    %175 = vdwg.mxu0
    %v176 = vld [vmem:[#allocation6 + $0x40] sm:$0xff]
    %v177 = vld [vmem:[#allocation6 + $0x48] sm:$0xff]
    %v178 = vld [vmem:[#allocation6 + $0x50] sm:$0xff]
    %v179 = vperm.slane %v76, 4
    %vm180 = vcmask 195584
    %v182 = vsel %vm180, %v79, 0
    %184 = vmatpush.msra.mxu0 0.0
    %185 = vmatpush.msra.mxu0 0.0
    %186 = vmatpush.msra.mxu0 0.0
    %187 = vmatpush.msra.mxu0 0.0
    %188 = vmatpush.msra.mxu0 0.0
    %189 = vmatpush.msra.mxu0 0.0
    %190 = vmatpush.msra.mxu0 0.0
    %191 = vmatpush.msra.mxu0 0.0
    %192 = vmatpush.msra.mxu0 0.0
    %193 = vmatpush.msra.mxu0 0.0
    %194 = vmatpush.msra.mxu0 0.0
    %195 = vmatpush.msra.mxu0 0.0
    %196 = vmatpush.msra.mxu0 0.0
    %197 = vmatpush.msra.mxu0 %v178
    %198 = vmatpush.msra.mxu0 %v177
    %199 = vmatpush.msra.mxu0 %v176
    %200 = vmatmul.f32.gmra.mxu0 %v182
    %v201 = vpop.f32.mrf.mxu0
    %v202 = vadd.f32 %v179, %v201
    %203 = vdwg.mxu0
    %v204 = vmax.f32 %v202, 0.0
    %v205 = vrot.slane %v204, 4
    %v206 = vadd.f32 %v204, %v205
    %v207 = vrot.slane %v206, 2
    %v208 = vadd.f32 %v206, %v207
    %v209 = vrot.slane %v208, 1
    %v210 = vadd.f32 %v208, %v209
    %v211 = vmul.f32 %v210, %v120
    %v212 = vsub.f32 %v204, %v211
    %v213 = vmul.f32 %v212, %v212
    %v214 = vrot.slane %v213, 4
    %v215 = vadd.f32 %v213, %v214
    %v216 = vrot.slane %v215, 2
    %v217 = vadd.f32 %v215, %v216
    %v218 = vrot.slane %v217, 1
    %v219 = vadd.f32 %v217, %v218
    %v220 = vmul.f32 %v219, %v120
    %v221 = vadd.f32 %v220, 1e-05
    %v222 = vrsqrt.pop %v221
    %v223 = vmul.f32 %v222, %v221
    %v224 = vmul.f32 %v223, %v222
    %v225 = vmul.f32 0.5, %v224
    %v226 = vsub.f32 1.5, %v225
    %v227 = vmul.f32 %v222, %v226
    %vm228 = vweird.f32 %v221
    %vm229 = vweird.f32 %v222
    %vm230 = vmor %vm228, %vm229
    %v231 = vsel %vm230, %v222, %v227
    %v232 = vmul.f32 %v212, %v231
    %v233 = vperm.slane %v76, 5
    %v234 = vmul.f32 %v232, %v233
    %v235 = vperm.slane %v76, 6
    %v236 = vadd.f32 %v234, %v235
    %v237 = vld [vmem:[#allocation6 + $0x60] sm:$0xff]
    %v238 = vld [vmem:[#allocation6 + $0x68] sm:$0xff]
    %v239 = vld [vmem:[#allocation6 + $0x70] sm:$0xff]
    %v240 = vld [vmem:[#allocation6 + $0x78] sm:$0xff]
    %v241 = vperm.slane %v76, 7
    %v243 = vsel %vm152, %v236, 0
    %245 = vmatpush.msra.mxu0 0.0
    %246 = vmatpush.msra.mxu0 0.0
    %247 = vmatpush.msra.mxu0 0.0
    %248 = vmatpush.msra.mxu0 0.0
    %249 = vmatpush.msra.mxu0 0.0
    %250 = vmatpush.msra.mxu0 0.0
    %251 = vmatpush.msra.mxu0 0.0
    %252 = vmatpush.msra.mxu0 0.0
    %253 = vmatpush.msra.mxu0 0.0
    %254 = vmatpush.msra.mxu0 0.0
    %255 = vmatpush.msra.mxu0 0.0
    %256 = vmatpush.msra.mxu0 0.0
    %257 = vmatpush.msra.mxu0 %v240
    %258 = vmatpush.msra.mxu0 %v239
    %259 = vmatpush.msra.mxu0 %v238
    %260 = vmatpush.msra.mxu0 %v237
    %261 = vmatmul.f32.gmra.mxu0 %v243
    %v262 = vpop.f32.mrf.mxu0
    %v263 = vadd.f32 %v241, %v262
    %264 = vdwg.mxu0
    %v265 = vld [vmem:[#allocation6 + $0x80] sm:$0xff]
    %v266 = vld [vmem:[#allocation6 + $0x88] sm:$0xff]
    %v267 = vld [vmem:[#allocation6 + $0x90] sm:$0xff]
    %v268 = vld [vmem:[#allocation6 + $0x98] sm:$0xff]
    %v269 = vperm.slane %v77, 0
    %v271 = vsel %vm152, %v174, 0
    %273 = vmatpush.msra.mxu0 0.0
    %274 = vmatpush.msra.mxu0 0.0
    %275 = vmatpush.msra.mxu0 0.0
    %276 = vmatpush.msra.mxu0 0.0
    %277 = vmatpush.msra.mxu0 0.0
    %278 = vmatpush.msra.mxu0 0.0
    %279 = vmatpush.msra.mxu0 0.0
    %280 = vmatpush.msra.mxu0 0.0
    %281 = vmatpush.msra.mxu0 0.0
    %282 = vmatpush.msra.mxu0 0.0
    %283 = vmatpush.msra.mxu0 0.0
    %284 = vmatpush.msra.mxu0 0.0
    %285 = vmatpush.msra.mxu0 %v268
    %286 = vmatpush.msra.mxu0 %v267
    %287 = vmatpush.msra.mxu0 %v266
    %288 = vmatpush.msra.mxu0 %v265
    %289 = vmatmul.f32.gmra.mxu0 %v271
    %v290 = vpop.f32.mrf.mxu0
    %v291 = vadd.f32 %v269, %v290
    %292 = vdwg.mxu0
    %v293 = vld [vmem:[#allocation6 + $0xa0] sm:$0xff]
    %v294 = vld [vmem:[#allocation6 + $0xa8] sm:$0xff]
    %v295 = vld [vmem:[#allocation6 + $0xb0] sm:$0xff]
    %v296 = vld [vmem:[#allocation6 + $0xb8] sm:$0xff]
    %v297 = vperm.slane %v77, 1
    %298 = vmatpush.msra.mxu0 0.0
    %299 = vmatpush.msra.mxu0 0.0
    %300 = vmatpush.msra.mxu0 0.0
    %301 = vmatpush.msra.mxu0 0.0
    %302 = vmatpush.msra.mxu0 0.0
    %303 = vmatpush.msra.mxu0 0.0
    %304 = vmatpush.msra.mxu0 0.0
    %305 = vmatpush.msra.mxu0 0.0
    %306 = vmatpush.msra.mxu0 0.0
    %307 = vmatpush.msra.mxu0 0.0
    %308 = vmatpush.msra.mxu0 0.0
    %309 = vmatpush.msra.mxu0 0.0
    %310 = vmatpush.msra.mxu0 %v296
    %311 = vmatpush.msra.mxu0 %v295
    %312 = vmatpush.msra.mxu0 %v294
    %313 = vmatpush.msra.mxu0 %v293
    %314 = vmatmul.f32.gmra.mxu0 %v271
    %v315 = vpop.f32.mrf.mxu0
    %v316 = vadd.f32 %v297, %v315
    %317 = vdwg.mxu0
    %v318 = vld [vmem:[#allocation6 + $0xc0] sm:$0xff]
    %v319 = vld [vmem:[#allocation6 + $0xc8] sm:$0xff]
    %v320 = vld [vmem:[#allocation6 + $0xd0] sm:$0xff]
    %v321 = vld [vmem:[#allocation6 + $0xd8] sm:$0xff]
    %v322 = vperm.slane %v77, 2
    %323 = vmatpush.msra.mxu0 0.0
    %324 = vmatpush.msra.mxu0 0.0
    %325 = vmatpush.msra.mxu0 0.0
    %326 = vmatpush.msra.mxu0 0.0
    %327 = vmatpush.msra.mxu0 0.0
    %328 = vmatpush.msra.mxu0 0.0
    %329 = vmatpush.msra.mxu0 0.0
    %330 = vmatpush.msra.mxu0 0.0
    %331 = vmatpush.msra.mxu0 0.0
    %332 = vmatpush.msra.mxu0 0.0
    %333 = vmatpush.msra.mxu0 0.0
    %334 = vmatpush.msra.mxu0 0.0
    %335 = vmatpush.msra.mxu0 %v321
    %336 = vmatpush.msra.mxu0 %v320
    %337 = vmatpush.msra.mxu0 %v319
    %338 = vmatpush.msra.mxu0 %v318
    %339 = vmatmul.f32.gmra.mxu0 %v271
    %v340 = vpop.f32.mrf.mxu0
    %v341 = vadd.f32 %v322, %v340
    %342 = vdwg.mxu0
    %v343 = vld [vmem:[#allocation6 + $0xe0] sm:$0xff]
    %v344 = vld [vmem:[#allocation6 + $0xe8] sm:$0xff]
    %v345 = vld [vmem:[#allocation6 + $0xf0] sm:$0xff]
    %v346 = vld [vmem:[#allocation6 + $0xf8] sm:$0xff]
    %v347 = vperm.slane %v77, 3
    %v349 = vsel %vm152, %v263, 0
    %351 = vmatpush.msra.mxu0 0.0
    %352 = vmatpush.msra.mxu0 0.0
    %353 = vmatpush.msra.mxu0 0.0
    %354 = vmatpush.msra.mxu0 0.0
    %355 = vmatpush.msra.mxu0 0.0
    %356 = vmatpush.msra.mxu0 0.0
    %357 = vmatpush.msra.mxu0 0.0
    %358 = vmatpush.msra.mxu0 0.0
    %359 = vmatpush.msra.mxu0 0.0
    %360 = vmatpush.msra.mxu0 0.0
    %361 = vmatpush.msra.mxu0 0.0
    %362 = vmatpush.msra.mxu0 0.0
    %363 = vmatpush.msra.mxu0 %v346
    %364 = vmatpush.msra.mxu0 %v345
    %365 = vmatpush.msra.mxu0 %v344
    %366 = vmatpush.msra.mxu0 %v343
    %367 = vmatmul.f32.gmra.mxu0 %v349
    %v368 = vpop.f32.mrf.mxu0
    %v369 = vadd.f32 %v347, %v368
    %370 = vdwg.mxu0
    %v371 = vld [vmem:[#allocation6 + $0x100] sm:$0xff]
    %v372 = vld [vmem:[#allocation6 + $0x108] sm:$0xff]
    %v373 = vld [vmem:[#allocation6 + $0x110] sm:$0xff]
    %v374 = vld [vmem:[#allocation6 + $0x118] sm:$0xff]
    %v375 = vperm.slane %v77, 4
    %376 = vmatpush.msra.mxu0 0.0
    %377 = vmatpush.msra.mxu0 0.0
    %378 = vmatpush.msra.mxu0 0.0
    %379 = vmatpush.msra.mxu0 0.0
    %380 = vmatpush.msra.mxu0 0.0
    %381 = vmatpush.msra.mxu0 0.0
    %382 = vmatpush.msra.mxu0 0.0
    %383 = vmatpush.msra.mxu0 0.0
    %384 = vmatpush.msra.mxu0 0.0
    %385 = vmatpush.msra.mxu0 0.0
    %386 = vmatpush.msra.mxu0 0.0
    %387 = vmatpush.msra.mxu0 0.0
    %388 = vmatpush.msra.mxu0 %v374
    %389 = vmatpush.msra.mxu0 %v373
    %390 = vmatpush.msra.mxu0 %v372
    %391 = vmatpush.msra.mxu0 %v371
    %392 = vmatmul.f32.gmra.mxu0 %v349
    %v393 = vpop.f32.mrf.mxu0
    %v394 = vadd.f32 %v375, %v393
    %395 = vdwg.mxu0
    %v396 = vld [vmem:[#allocation6 + $0x120] sm:$0xff]
    %v397 = vld [vmem:[#allocation6 + $0x128] sm:$0xff]
    %v398 = vld [vmem:[#allocation6 + $0x130] sm:$0xff]
    %v399 = vld [vmem:[#allocation6 + $0x138] sm:$0xff]
    %v400 = vperm.slane %v77, 5
    %401 = vmatpush.msra.mxu0 0.0
    %402 = vmatpush.msra.mxu0 0.0
    %403 = vmatpush.msra.mxu0 0.0
    %404 = vmatpush.msra.mxu0 0.0
    %405 = vmatpush.msra.mxu0 0.0
    %406 = vmatpush.msra.mxu0 0.0
    %407 = vmatpush.msra.mxu0 0.0
    %408 = vmatpush.msra.mxu0 0.0
    %409 = vmatpush.msra.mxu0 0.0
    %410 = vmatpush.msra.mxu0 0.0
    %411 = vmatpush.msra.mxu0 0.0
    %412 = vmatpush.msra.mxu0 0.0
    %413 = vmatpush.msra.mxu0 %v399
    %414 = vmatpush.msra.mxu0 %v398
    %415 = vmatpush.msra.mxu0 %v397
    %416 = vmatpush.msra.mxu0 %v396
    %417 = vmatmul.f32.gmra.mxu0 %v349
    %v418 = vpop.f32.mrf.mxu0
    %v419 = vadd.f32 %v400, %v418
    %420 = vdwg.mxu0
    %421 = vxpose.xlu0.b32.start [1/16] %v291, 128
    %422 = vxpose.xlu0.b32.cont [2/16] 0.0, 128
    %423 = vxpose.xlu0.b32.cont [3/16] 0.0, 128
    %424 = vxpose.xlu0.b32.cont [4/16] 0.0, 128
    %425 = vxpose.xlu0.b32.cont [5/16] 0.0, 128
    %426 = vxpose.xlu0.b32.cont [6/16] 0.0, 128
    %427 = vxpose.xlu0.b32.cont [7/16] 0.0, 128
    %428 = vxpose.xlu0.b32.cont [8/16] 0.0, 128
    %429 = vxpose.xlu0.b32.cont [9/16] 0.0, 128
    %430 = vxpose.xlu0.b32.cont [10/16] 0.0, 128
    %431 = vxpose.xlu0.b32.cont [11/16] 0.0, 128
    %432 = vxpose.xlu0.b32.cont [12/16] 0.0, 128
    %433 = vxpose.xlu0.b32.cont [13/16] 0.0, 128
    %434 = vxpose.xlu0.b32.cont [14/16] 0.0, 128
    %435 = vxpose.xlu0.b32.cont [15/16] 0.0, 128
    %436 = vxpose.xlu0.b32.end [16/16] 0.0, 128
    %v437 = vpop.trf.xlu0
    %v438 = vpop.trf.xlu0
    %v439 = vpop.trf.xlu0
    %v440 = vpop.trf.xlu0
    %v441 = vpop.trf.xlu0
    %v442 = vpop.trf.xlu0
    %v443 = vpop.trf.xlu0
    %v444 = vpop.trf.xlu0
    %v445 = vpop.trf.xlu0
    %v446 = vpop.trf.xlu0
    %v447 = vpop.trf.xlu0
    %v448 = vpop.trf.xlu0
    %v449 = vpop.trf.xlu0
    %v450 = vpop.trf.xlu0
    %v451 = vpop.trf.xlu0
    %v452 = vpop.trf.xlu0
    %vm453 = vcmask 64512
    %v455 = vsel %vm453, %v437, 0
    %v458 = vsel %vm453, %v438, 0
    %v461 = vsel %vm453, %v439, 0
    %v464 = vsel %vm453, %v440, 0
    %466 = vmatpush.msra.mxu0 0.0
    %467 = vmatpush.msra.mxu0 0.0
    %468 = vmatpush.msra.mxu0 0.0
    %469 = vmatpush.msra.mxu0 0.0
    %470 = vmatpush.msra.mxu0 0.0
    %471 = vmatpush.msra.mxu0 0.0
    %472 = vmatpush.msra.mxu0 0.0
    %473 = vmatpush.msra.mxu0 0.0
    %474 = vmatpush.msra.mxu0 0.0
    %475 = vmatpush.msra.mxu0 0.0
    %476 = vmatpush.msra.mxu0 0.0
    %477 = vmatpush.msra.mxu0 0.0
    %478 = vmatpush.msra.mxu0 0.0
    %479 = vmatpush.msra.mxu0 0.0
    %480 = vmatpush.msra.mxu0 0.0
    %481 = vmatpush.msra.mxu0 %v316
    %482 = vmatmul.f32.gmra.mxu0 %v455
    %v483 = vpop.f32.mrf.mxu0
    %v484 = vadd.f32 0.0, %v483
    %485 = vmatmul.f32.gmra.mxu0 %v458
    %v486 = vpop.f32.mrf.mxu0
    %v487 = vadd.f32 0.0, %v486
    %488 = vmatmul.f32.gmra.mxu0 %v461
    %v489 = vpop.f32.mrf.mxu0
    %v490 = vadd.f32 0.0, %v489
    %491 = vmatmul.f32.gmra.mxu0 %v464
    %v492 = vpop.f32.mrf.mxu0
    %v493 = vadd.f32 0.0, %v492
    %494 = vdwg.mxu0
    %v495 = vmax.f32 %v484, %v487
    %v496 = vmax.f32 %v490, %v493
    %v497 = vmax.f32 %v495, %v496
    %v498 = vrot.slane %v497, 4
    %v499 = vmax.f32 %v497, %v498
    %v500 = vrot.slane %v499, 2
    %v501 = vmax.f32 %v499, %v500
    %v502 = vrot.slane %v501, 1
    %v503 = vmax.f32 %v501, %v502
    %v504 = vsub.f32 %v484, %v503
    %v505 = vsub.f32 %v487, %v503
    %v506 = vsub.f32 %v490, %v503
    %v507 = vsub.f32 %v493, %v503
    %v508 = vmul.f32 %v504, 1.442695
    %v509 = vpow.pop %v508
    %v510 = vmul.f32 %v505, 1.442695
    %v511 = vpow.pop %v510
    %v512 = vmul.f32 %v506, 1.442695
    %v513 = vpow.pop %v512
    %v514 = vmul.f32 %v507, 1.442695
    %v515 = vpow.pop %v514
    %v516 = vadd.f32 %v509, %v511
    %v517 = vadd.f32 %v516, %v513
    %v518 = vadd.f32 %v517, %v515
    %v519 = vrot.slane %v518, 4
    %v520 = vadd.f32 %v518, %v519
    %v521 = vrot.slane %v520, 2
    %v522 = vadd.f32 %v520, %v521
    %v523 = vrot.slane %v522, 1
    %v524 = vadd.f32 %v522, %v523
    %v525 = vrcp.pop %v524
    %v526 = vmul.f32 %v524, %v525
    %v527 = vsub.f32 1.0, %v526
    %v528 = vmul.f32 %v525, %v527
    %v529 = vadd.f32 %v525, %v528
    %vm530 = vweird.f32 %v524
    %vm531 = vweird.f32 %v525
    %vm532 = vmor %vm530, %vm531
    %v533 = vsel %vm532, %v525, %v529
    %v534 = vand.u32 2147483647, %v524
    %vm535 = vcmp.eq.f32.partialorder %v534, 8.507059e+37
    %v536 = vand.u32 %v524, 2147483648
    %v537 = vor.u32 1.1754944e-38, %v536
    %v538 = vsel %vm535, %v537, %v533
    %v539 = vmul.f32 %v509, %v538
    %v540 = vmul.f32 %v511, %v538
    %v541 = vmul.f32 %v513, %v538
    %v542 = vmul.f32 %v515, %v538
    %543 = vxpose.xlu0.b32.start [1/16] %v369, 128
    %544 = vxpose.xlu0.b32.cont [2/16] 0.0, 128
    %545 = vxpose.xlu0.b32.cont [3/16] 0.0, 128
    %546 = vxpose.xlu0.b32.cont [4/16] 0.0, 128
    %547 = vxpose.xlu0.b32.cont [5/16] 0.0, 128
    %548 = vxpose.xlu0.b32.cont [6/16] 0.0, 128
    %549 = vxpose.xlu0.b32.cont [7/16] 0.0, 128
    %550 = vxpose.xlu0.b32.cont [8/16] 0.0, 128
    %551 = vxpose.xlu0.b32.cont [9/16] 0.0, 128
    %552 = vxpose.xlu0.b32.cont [10/16] 0.0, 128
    %553 = vxpose.xlu0.b32.cont [11/16] 0.0, 128
    %554 = vxpose.xlu0.b32.cont [12/16] 0.0, 128
    %555 = vxpose.xlu0.b32.cont [13/16] 0.0, 128
    %556 = vxpose.xlu0.b32.cont [14/16] 0.0, 128
    %557 = vxpose.xlu0.b32.cont [15/16] 0.0, 128
    %558 = vxpose.xlu0.b32.end [16/16] 0.0, 128
    %v559 = vpop.trf.xlu0
    %v560 = vpop.trf.xlu0
    %v561 = vpop.trf.xlu0
    %v562 = vpop.trf.xlu0
    %v563 = vpop.trf.xlu0
    %v564 = vpop.trf.xlu0
    %v565 = vpop.trf.xlu0
    %v566 = vpop.trf.xlu0
    %v567 = vpop.trf.xlu0
    %v568 = vpop.trf.xlu0
    %v569 = vpop.trf.xlu0
    %v570 = vpop.trf.xlu0
    %v571 = vpop.trf.xlu0
    %v572 = vpop.trf.xlu0
    %v573 = vpop.trf.xlu0
    %v574 = vpop.trf.xlu0
    %v576 = vsel %vm453, %v559, 0
    %v579 = vsel %vm453, %v560, 0
    %v582 = vsel %vm453, %v561, 0
    %v585 = vsel %vm453, %v562, 0
    %587 = vmatpush.msra.mxu0 0.0
    %588 = vmatpush.msra.mxu0 0.0
    %589 = vmatpush.msra.mxu0 0.0
    %590 = vmatpush.msra.mxu0 0.0
    %591 = vmatpush.msra.mxu0 0.0
    %592 = vmatpush.msra.mxu0 0.0
    %593 = vmatpush.msra.mxu0 0.0
    %594 = vmatpush.msra.mxu0 0.0
    %595 = vmatpush.msra.mxu0 0.0
    %596 = vmatpush.msra.mxu0 0.0
    %597 = vmatpush.msra.mxu0 0.0
    %598 = vmatpush.msra.mxu0 0.0
    %599 = vmatpush.msra.mxu0 0.0
    %600 = vmatpush.msra.mxu0 0.0
    %601 = vmatpush.msra.mxu0 0.0
    %602 = vmatpush.msra.mxu0 %v316
    %603 = vmatmul.f32.gmra.mxu0 %v576
    %v604 = vpop.f32.mrf.mxu0
    %v605 = vadd.f32 0.0, %v604
    %606 = vmatmul.f32.gmra.mxu0 %v579
    %v607 = vpop.f32.mrf.mxu0
    %v608 = vadd.f32 0.0, %v607
    %609 = vmatmul.f32.gmra.mxu0 %v582
    %v610 = vpop.f32.mrf.mxu0
    %v611 = vadd.f32 0.0, %v610
    %612 = vmatmul.f32.gmra.mxu0 %v585
    %v613 = vpop.f32.mrf.mxu0
    %v614 = vadd.f32 0.0, %v613
    %615 = vdwg.mxu0
    %v616 = vmax.f32 %v605, %v608
    %v617 = vmax.f32 %v611, %v614
    %v618 = vmax.f32 %v616, %v617
    %v619 = vrot.slane %v618, 4
    %v620 = vmax.f32 %v618, %v619
    %v621 = vrot.slane %v620, 2
    %v622 = vmax.f32 %v620, %v621
    %v623 = vrot.slane %v622, 1
    %v624 = vmax.f32 %v622, %v623
    %v625 = vsub.f32 %v605, %v624
    %v626 = vsub.f32 %v608, %v624
    %v627 = vsub.f32 %v611, %v624
    %v628 = vsub.f32 %v614, %v624
    %v629 = vmul.f32 %v625, 1.442695
    %v630 = vpow.pop %v629
    %v631 = vmul.f32 %v626, 1.442695
    %v632 = vpow.pop %v631
    %v633 = vmul.f32 %v627, 1.442695
    %v634 = vpow.pop %v633
    %v635 = vmul.f32 %v628, 1.442695
    %v636 = vpow.pop %v635
    %v637 = vadd.f32 %v630, %v632
    %v638 = vadd.f32 %v637, %v634
    %v639 = vadd.f32 %v638, %v636
    %v640 = vrot.slane %v639, 4
    %v641 = vadd.f32 %v639, %v640
    %v642 = vrot.slane %v641, 2
    %v643 = vadd.f32 %v641, %v642
    %v644 = vrot.slane %v643, 1
    %v645 = vadd.f32 %v643, %v644
    %v646 = vrcp.pop %v645
    %v647 = vmul.f32 %v645, %v646
    %v648 = vsub.f32 1.0, %v647
    %v649 = vmul.f32 %v646, %v648
    %v650 = vadd.f32 %v646, %v649
    %vm651 = vweird.f32 %v645
    %vm652 = vweird.f32 %v646
    %vm653 = vmor %vm651, %vm652
    %v654 = vsel %vm653, %v646, %v650
    %v655 = vand.u32 2147483647, %v645
    %vm656 = vcmp.eq.f32.partialorder %v655, 8.507059e+37
    %v657 = vand.u32 %v645, 2147483648
    %v658 = vor.u32 1.1754944e-38, %v657
    %v659 = vsel %vm656, %v658, %v654
    %v660 = vmul.f32 %v630, %v659
    %v661 = vmul.f32 %v632, %v659
    %v662 = vmul.f32 %v634, %v659
    %v663 = vmul.f32 %v636, %v659
    %v664 = vadd.f32 %v539, %v660
    %v665 = vadd.f32 %v540, %v661
    %v666 = vadd.f32 %v541, %v662
    %v667 = vadd.f32 %v542, %v663
    %668 = vmatpush.msra.mxu0 0.0
    %669 = vmatpush.msra.mxu0 0.0
    %670 = vmatpush.msra.mxu0 0.0
    %671 = vmatpush.msra.mxu0 0.0
    %672 = vmatpush.msra.mxu0 0.0
    %673 = vmatpush.msra.mxu0 0.0
    %674 = vmatpush.msra.mxu0 0.0
    %675 = vmatpush.msra.mxu0 0.0
    %676 = vmatpush.msra.mxu0 0.0
    %677 = vmatpush.msra.mxu0 0.0
    %678 = vmatpush.msra.mxu0 0.0
    %679 = vmatpush.msra.mxu0 0.0
    %680 = vmatpush.msra.mxu0 0.0
    %681 = vmatpush.msra.mxu0 0.0
    %682 = vmatpush.msra.mxu0 0.0
    %683 = vmatpush.msra.mxu0 %v394
    %684 = vmatmul.f32.gmra.mxu0 %v455
    %v685 = vpop.f32.mrf.mxu0
    %v686 = vadd.f32 0.0, %v685
    %687 = vmatmul.f32.gmra.mxu0 %v458
    %v688 = vpop.f32.mrf.mxu0
    %v689 = vadd.f32 0.0, %v688
    %690 = vmatmul.f32.gmra.mxu0 %v461
    %v691 = vpop.f32.mrf.mxu0
    %v692 = vadd.f32 0.0, %v691
    %693 = vmatmul.f32.gmra.mxu0 %v464
    %v694 = vpop.f32.mrf.mxu0
    %v695 = vadd.f32 0.0, %v694
    %696 = vdwg.mxu0
    %v697 = vmax.f32 %v686, %v689
    %v698 = vmax.f32 %v692, %v695
    %v699 = vmax.f32 %v697, %v698
    %v700 = vrot.slane %v699, 4
    %v701 = vmax.f32 %v699, %v700
    %v702 = vrot.slane %v701, 2
    %v703 = vmax.f32 %v701, %v702
    %v704 = vrot.slane %v703, 1
    %v705 = vmax.f32 %v703, %v704
    %v706 = vsub.f32 %v686, %v705
    %v707 = vsub.f32 %v689, %v705
    %v708 = vsub.f32 %v692, %v705
    %v709 = vsub.f32 %v695, %v705
    %v710 = vmul.f32 %v706, 1.442695
    %v711 = vpow.pop %v710
    %v712 = vmul.f32 %v707, 1.442695
    %v713 = vpow.pop %v712
    %v714 = vmul.f32 %v708, 1.442695
    %v715 = vpow.pop %v714
    %v716 = vmul.f32 %v709, 1.442695
    %v717 = vpow.pop %v716
    %v718 = vadd.f32 %v711, %v713
    %v719 = vadd.f32 %v718, %v715
    %v720 = vadd.f32 %v719, %v717
    %v721 = vrot.slane %v720, 4
    %v722 = vadd.f32 %v720, %v721
    %v723 = vrot.slane %v722, 2
    %v724 = vadd.f32 %v722, %v723
    %v725 = vrot.slane %v724, 1
    %v726 = vadd.f32 %v724, %v725
    %v727 = vrcp.pop %v726
    %v728 = vmul.f32 %v726, %v727
    %v729 = vsub.f32 1.0, %v728
    %v730 = vmul.f32 %v727, %v729
    %v731 = vadd.f32 %v727, %v730
    %vm732 = vweird.f32 %v726
    %vm733 = vweird.f32 %v727
    %vm734 = vmor %vm732, %vm733
    %v735 = vsel %vm734, %v727, %v731
    %v736 = vand.u32 2147483647, %v726
    %vm737 = vcmp.eq.f32.partialorder %v736, 8.507059e+37
    %v738 = vand.u32 %v726, 2147483648
    %v739 = vor.u32 1.1754944e-38, %v738
    %v740 = vsel %vm737, %v739, %v735
    %v741 = vmul.f32 %v711, %v740
    %v742 = vmul.f32 %v713, %v740
    %v743 = vmul.f32 %v715, %v740
    %v744 = vmul.f32 %v717, %v740
    %745 = vmatpush.msra.mxu0 0.0
    %746 = vmatpush.msra.mxu0 0.0
    %747 = vmatpush.msra.mxu0 0.0
    %748 = vmatpush.msra.mxu0 0.0
    %749 = vmatpush.msra.mxu0 0.0
    %750 = vmatpush.msra.mxu0 0.0
    %751 = vmatpush.msra.mxu0 0.0
    %752 = vmatpush.msra.mxu0 0.0
    %753 = vmatpush.msra.mxu0 0.0
    %754 = vmatpush.msra.mxu0 0.0
    %755 = vmatpush.msra.mxu0 0.0
    %756 = vmatpush.msra.mxu0 0.0
    %757 = vmatpush.msra.mxu0 0.0
    %758 = vmatpush.msra.mxu0 0.0
    %759 = vmatpush.msra.mxu0 0.0
    %760 = vmatpush.msra.mxu0 %v394
    %761 = vmatmul.f32.gmra.mxu0 %v576
    %v762 = vpop.f32.mrf.mxu0
    %v763 = vadd.f32 0.0, %v762
    %764 = vmatmul.f32.gmra.mxu0 %v579
    %v765 = vpop.f32.mrf.mxu0
    %v766 = vadd.f32 0.0, %v765
    %767 = vmatmul.f32.gmra.mxu0 %v582
    %v768 = vpop.f32.mrf.mxu0
    %v769 = vadd.f32 0.0, %v768
    %770 = vmatmul.f32.gmra.mxu0 %v585
    %v771 = vpop.f32.mrf.mxu0
    %v772 = vadd.f32 0.0, %v771
    %773 = vdwg.mxu0
    %v774 = vmax.f32 %v763, %v766
    %v775 = vmax.f32 %v769, %v772
    %v776 = vmax.f32 %v774, %v775
    %v777 = vrot.slane %v776, 4
    %v778 = vmax.f32 %v776, %v777
    %v779 = vrot.slane %v778, 2
    %v780 = vmax.f32 %v778, %v779
    %v781 = vrot.slane %v780, 1
    %v782 = vmax.f32 %v780, %v781
    %v783 = vsub.f32 %v763, %v782
    %v784 = vsub.f32 %v766, %v782
    %v785 = vsub.f32 %v769, %v782
    %v786 = vsub.f32 %v772, %v782
    %v787 = vmul.f32 %v783, 1.442695
    %v788 = vpow.pop %v787
    %v789 = vmul.f32 %v784, 1.442695
    %v790 = vpow.pop %v789
    %v791 = vmul.f32 %v785, 1.442695
    %v792 = vpow.pop %v791
    %v793 = vmul.f32 %v786, 1.442695
    %v794 = vpow.pop %v793
    %v795 = vadd.f32 %v788, %v790
    %v796 = vadd.f32 %v795, %v792
    %v797 = vadd.f32 %v796, %v794
    %v798 = vrot.slane %v797, 4
    %v799 = vadd.f32 %v797, %v798
    %v800 = vrot.slane %v799, 2
    %v801 = vadd.f32 %v799, %v800
    %v802 = vrot.slane %v801, 1
    %v803 = vadd.f32 %v801, %v802
    %v804 = vrcp.pop %v803
    %v805 = vmul.f32 %v803, %v804
    %v806 = vsub.f32 1.0, %v805
    %v807 = vmul.f32 %v804, %v806
    %v808 = vadd.f32 %v804, %v807
    %vm809 = vweird.f32 %v803
    %vm810 = vweird.f32 %v804
    %vm811 = vmor %vm809, %vm810
    %v812 = vsel %vm811, %v804, %v808
    %v813 = vand.u32 2147483647, %v803
    %vm814 = vcmp.eq.f32.partialorder %v813, 8.507059e+37
    %v815 = vand.u32 %v803, 2147483648
    %v816 = vor.u32 1.1754944e-38, %v815
    %v817 = vsel %vm814, %v816, %v812
    %v818 = vmul.f32 %v788, %v817
    %v819 = vmul.f32 %v790, %v817
    %v820 = vmul.f32 %v792, %v817
    %v821 = vmul.f32 %v794, %v817
    %v822 = vadd.f32 %v741, %v818
    %v823 = vadd.f32 %v742, %v819
    %v824 = vadd.f32 %v743, %v820
    %v825 = vadd.f32 %v744, %v821
    %v827 = vsel %vm152, %v419, 0
    %829 = vmatpush.msra.mxu0 0.0
    %830 = vmatpush.msra.mxu0 0.0
    %831 = vmatpush.msra.mxu0 0.0
    %832 = vmatpush.msra.mxu0 0.0
    %833 = vmatpush.msra.mxu0 0.0
    %834 = vmatpush.msra.mxu0 0.0
    %835 = vmatpush.msra.mxu0 0.0
    %836 = vmatpush.msra.mxu0 0.0
    %837 = vmatpush.msra.mxu0 0.0
    %838 = vmatpush.msra.mxu0 0.0
    %839 = vmatpush.msra.mxu0 0.0
    %840 = vmatpush.msra.mxu0 0.0
    %841 = vmatpush.msra.mxu0 %v825
    %842 = vmatpush.msra.mxu0 %v824
    %843 = vmatpush.msra.mxu0 %v823
    %844 = vmatpush.msra.mxu0 %v822
    %845 = vmatmul.f32.gmra.mxu0 %v827
    %v846 = vpop.f32.mrf.mxu0
    %v847 = vadd.f32 0.0, %v846
    %848 = vdwg.mxu0
    %v850 = vsel %vm152, %v341, 0
    %852 = vmatpush.msra.mxu0 0.0
    %853 = vmatpush.msra.mxu0 0.0
    %854 = vmatpush.msra.mxu0 0.0
    %855 = vmatpush.msra.mxu0 0.0
    %856 = vmatpush.msra.mxu0 0.0
    %857 = vmatpush.msra.mxu0 0.0
    %858 = vmatpush.msra.mxu0 0.0
    %859 = vmatpush.msra.mxu0 0.0
    %860 = vmatpush.msra.mxu0 0.0
    %861 = vmatpush.msra.mxu0 0.0
    %862 = vmatpush.msra.mxu0 0.0
    %863 = vmatpush.msra.mxu0 0.0
    %864 = vmatpush.msra.mxu0 %v667
    %865 = vmatpush.msra.mxu0 %v666
    %866 = vmatpush.msra.mxu0 %v665
    %867 = vmatpush.msra.mxu0 %v664
    %868 = vmatmul.f32.gmra.mxu0 %v850
    %v869 = vpop.f32.mrf.mxu0
    %v870 = vadd.f32 %v847, %v869
    %871 = vdwg.mxu0
    %v872 = vld [vmem:[#allocation6 + $0x140] sm:$0xff]
    %v873 = vld [vmem:[#allocation6 + $0x148] sm:$0xff]
    %v874 = vld [vmem:[#allocation6 + $0x150] sm:$0xff]
    %v875 = vld [vmem:[#allocation6 + $0x158] sm:$0xff]
    %v876 = vperm.slane %v77, 6
    %v878 = vsel %vm152, %v870, 0
    %880 = vmatpush.msra.mxu0 0.0
    %881 = vmatpush.msra.mxu0 0.0
    %882 = vmatpush.msra.mxu0 0.0
    %883 = vmatpush.msra.mxu0 0.0
    %884 = vmatpush.msra.mxu0 0.0
    %885 = vmatpush.msra.mxu0 0.0
    %886 = vmatpush.msra.mxu0 0.0
    %887 = vmatpush.msra.mxu0 0.0
    %888 = vmatpush.msra.mxu0 0.0
    %889 = vmatpush.msra.mxu0 0.0
    %890 = vmatpush.msra.mxu0 0.0
    %891 = vmatpush.msra.mxu0 0.0
    %892 = vmatpush.msra.mxu0 %v875
    %893 = vmatpush.msra.mxu0 %v874
    %894 = vmatpush.msra.mxu0 %v873
    %895 = vmatpush.msra.mxu0 %v872
    %896 = vmatmul.f32.gmra.mxu0 %v878
    %v897 = vpop.f32.mrf.mxu0
    %v898 = vadd.f32 %v876, %v897
    %899 = vdwg.mxu0
    %900 = vst [vmem:[%s4] sm:$0xff] %v898
    %901 = vst [vmem:[%s4 + $0x8] sm:$0xff] %v664
    %902 = vst [vmem:[%s4 + $0x10] sm:$0xff] %v665
    %903 = vst [vmem:[%s4 + $0x18] sm:$0xff] %v666
    %904 = vst [vmem:[%s4 + $0x20] sm:$0xff] %v667
    %905 = vst [vmem:[%s4 + $0x28] sm:$0xff] %v822
    %906 = vst [vmem:[%s4 + $0x30] sm:$0xff] %v823
    %907 = vst [vmem:[%s4 + $0x38] sm:$0xff] %v824
    %908 = vst [vmem:[%s4 + $0x40] sm:$0xff] %v825
    // Predicated region
    $region34: #{cmff_forward.1} parent=1 // pred_check
      _
    $region35: #{cmff_forward.1} parent=1 // pred_check_branch
      %910 = sbr.rel (0) target = $region37
    $region36: #{cmff_forward.1} parent=1 // pred_region
      _
    $region37: #{cmff_forward.1} parent=1 // pred_fallthru
      _
    // Predicated region
    $region38: #{cmff_forward.1} parent=1 // pred_check
      _
    $region39: #{cmff_forward.1} parent=1 // pred_check_branch
      %912 = sbr.rel (0) target = $region41
    $region40: #{cmff_forward.1} parent=1 // pred_region
      _
    $region41: #{cmff_forward.1} parent=1 // pred_fallthru
      _
    %913 = vsyncpa [#allocation3], 1
    %914 = vsyncpa [#allocation5], 1
    %915 = vsyncpa [#allocation8], 1

</llo_original>
